<compile_context>
chip_gen: v7x
topology: tpu7x:2x2x1
jax: 0.10.0
libtpu: 0.0.40
codegen_flags: <defaults>
</compile_context>

<pallas_src>
import jax
import jax.numpy as jnp
from jax.experimental import pallas as pl
from jax.experimental.pallas import tpu as pltpu


def add_noise_kernel(x_ref, noise_ref, scale_ref, o_ref):
    # x_ref / noise_ref / o_ref: VMEM (TR, TC) f32 tiles of the flattened (N*C, H*W) array.
    # scale_ref: VMEM (TR, 1) f32 per-row (= per-(n,c)) scaling factor; broadcasts over lanes.
    o_ref[...] = x_ref[...] + noise_ref[...] * scale_ref[...]


def _choose_tiles(rows, cols):
    """Pick lane-dense, VMEM-friendly block sizes that evenly divide (rows, cols)."""
    # Columns: keep a multiple of 128 (lane-dense), cap ~2048 (f32 512x2048 = 4 MiB/tile,
    # safe double-buffered even under v5e's 16 MiB / v7x's 32 MiB default scoped VMEM).
    if cols % 128 == 0:
        tc = min(cols, 2048)
        while cols % tc != 0:
            tc //= 2
    else:
        tc = cols  # full dim (allowed even if not 128-aligned)
    # Rows: multiple of 8 (sublane-aligned), cap 512.
    if rows % 8 == 0:
        tr = min(rows, 512)
        while rows % tr != 0:
            tr //= 2
    else:
        tr = rows  # full dim
    return tr, tc


def add_noise(x, scaling_factor, key):
    """x: (N, C, H, W) float32, scaling_factor: (C,) float32, key: jax PRNG key."""
    N, C, H, W = x.shape
    rows, cols = N * C, H * W

    x2 = x.reshape(rows, cols)
    # torch.randn_like(x): standard-normal noise with the same shape/dtype as x.
    noise2 = jax.random.normal(key, (rows, cols), dtype=x.dtype)
    # Per-row scale: row r = (n, c) uses scaling_factor[c].
    scale_rows = jnp.broadcast_to(
        scaling_factor.astype(x.dtype)[None, :], (N, C)
    ).reshape(rows, 1)

    tr, tc = _choose_tiles(rows, cols)
    grid = (rows // tr, cols // tc)

    itemsize = jnp.dtype(x.dtype).itemsize
    cost = pl.CostEstimate(
        flops=2 * rows * cols,                       # one mul + one add per element
        transcendentals=0,
        bytes_accessed=(3 * rows * cols + rows) * itemsize,
    )

    out2 = pl.pallas_call(
        add_noise_kernel,
        out_shape=jax.ShapeDtypeStruct((rows, cols), x.dtype),
        grid=grid,
        in_specs=[
            pl.BlockSpec((tr, tc), lambda i, j: (i, j)),   # x
            pl.BlockSpec((tr, tc), lambda i, j: (i, j)),   # noise
            pl.BlockSpec((tr, 1), lambda i, j: (i, 0)),    # per-row scale
        ],
        out_specs=pl.BlockSpec((tr, tc), lambda i, j: (i, j)),
        compiler_params=pltpu.CompilerParams(
            dimension_semantics=("parallel", "parallel")),
        cost_estimate=cost,
    )(x2, noise2, scale_rows)

    return out2.reshape(N, C, H, W)


if __name__ == "__main__":
    N, C, H, W = 2, 4, 16, 16
    key = jax.random.PRNGKey(0)
    kx, kn = jax.random.split(key)
    x = jax.random.normal(kx, (N, C, H, W), dtype=jnp.float32)

    # Deterministic parameter init matching nn.Parameter(torch.zeros(channels)).
    scaling_factor = jnp.zeros((C,), dtype=jnp.float32)

    # With zero scaling factor the module is the identity: out == x exactly.
    out0 = add_noise(x, scaling_factor, kn)
    out0 = jax.block_until_ready(out0)
    assert out0.shape == x.shape and out0.dtype == x.dtype
    assert jnp.allclose(out0, x), "zero scaling_factor should reproduce x exactly"

    # Exercise the noise path with a nonzero (still deterministic) scaling factor.
    scaling_factor2 = jnp.full((C,), 0.1, dtype=jnp.float32)
    out1 = add_noise(x, scaling_factor2, jax.random.PRNGKey(123))
    out1 = jax.block_until_ready(out1)
    assert out1.shape == x.shape
    assert bool(jnp.all(jnp.isfinite(out1)))
    # Noise actually changed the output somewhere.
    assert not bool(jnp.allclose(out1, x))

    print("KERNEL_OK")
</pallas_src>

<mosaic_0001>
module attributes {stable_mosaic.version = 11 : i64} {
  func.func @add_noise_kernel(%arg0: i32, %arg1: i32, %arg2: memref<8x256xf32, #tpu.memory_space<vmem>>, %arg3: memref<8x256xf32, #tpu.memory_space<vmem>>, %arg4: memref<8x1xf32, #tpu.memory_space<vmem>>, %arg5: memref<8x256xf32, #tpu.memory_space<vmem>>) attributes {dimension_semantics = [#tpu.dimension_semantics<parallel>, #tpu.dimension_semantics<parallel>], iteration_bounds = array<i64: 1, 1>, scalar_prefetch = 0 : i64, scratch_operands = 0 : i64, tpu.core_type = #tpu.core_type<tc>, window_params = [{transform_indices = @transform_0, window_bounds = array<i64: 8, 256>}, {transform_indices = @transform_1, window_bounds = array<i64: 8, 256>}, {transform_indices = @transform_2, window_bounds = array<i64: 8, 1>}, {transform_indices = @transform_3, window_bounds = array<i64: 8, 256>}]} {
    %c0 = arith.constant 0 : index
    %c0_0 = arith.constant 0 : index
    %0 = vector.load %arg2[%c0, %c0_0] : memref<8x256xf32, #tpu.memory_space<vmem>>, vector<8x256xf32>
    %c0_1 = arith.constant 0 : index
    %c0_2 = arith.constant 0 : index
    %1 = vector.load %arg3[%c0_1, %c0_2] : memref<8x256xf32, #tpu.memory_space<vmem>>, vector<8x256xf32>
    %c0_3 = arith.constant 0 : index
    %c0_4 = arith.constant 0 : index
    %2 = vector.load %arg4[%c0_3, %c0_4] : memref<8x1xf32, #tpu.memory_space<vmem>>, vector<8x1xf32>
    %3 = vector.broadcast %2 : vector<8x1xf32> to vector<8x256xf32>
    %4 = arith.mulf %1, %3 : vector<8x256xf32>
    %5 = arith.addf %0, %4 : vector<8x256xf32>
    %c0_5 = arith.constant 0 : index
    %c0_6 = arith.constant 0 : index
    %6 = vector.load %arg5[%c0_5, %c0_6] : memref<8x256xf32, #tpu.memory_space<vmem>>, vector<8x256xf32>
    tpu.vector_store %arg5[%c0_5, %c0_6], %5 {strides = array<i32>} : memref<8x256xf32, #tpu.memory_space<vmem>>, vector<8x256xf32>,
    return
  }
  func.func @transform_0(%arg0: i32, %arg1: i32) -> (i32, i32) {
    %c0_i32 = arith.constant 0 : i32
    return %arg0, %arg1 : i32, i32
  }
  func.func @transform_1(%arg0: i32, %arg1: i32) -> (i32, i32) {
    %c0_i32 = arith.constant 0 : i32
    return %arg0, %arg1 : i32, i32
  }
  func.func @transform_2(%arg0: i32, %arg1: i32) -> (i32, i32) {
    %c0_i32 = arith.constant 0 : i32
    %c0_i32_0 = arith.constant 0 : i32
    return %arg0, %c0_i32 : i32, i32
  }
  func.func @transform_3(%arg0: i32, %arg1: i32) -> (i32, i32) {
    %c0_i32 = arith.constant 0 : i32
    return %arg0, %arg1 : i32, i32
  }
}

</mosaic_0001>

<llo_original>
// kernel: tpu_custom_call.1
$region0: #{tpu_custom_call.1}
  #allocation0 [shape = 'u32[]', space=smem, size = 0x4, offset = 0x4, fixed_abs, tag = 'smem constant byte address 0x4 - core index']
  #allocation1 [shape = 'u32[144,128]{1,0:T(1,128)}', space=vmem, size = 0x12000, scoped, tag = 'internal scratch']
  %s0 = inlined_call_operand.hbm [shape: f32[8,256], index: 0, kind: input, shape index: {}]
  %s1 = inlined_call_operand.hbm [shape: f32[8,256], index: 1, kind: input, shape index: {}]
  %s2 = inlined_call_operand.vmem [shape: f32[8,1], index: 2, kind: input, shape index: {}]
  %s3 = inlined_call_operand.hbm [shape: f32[8,256], index: 3, kind: output, shape index: {}]
  %s4 = sld [smem:[#allocation0]]
  $region30: #{tpu_custom_call.1} parent=0
    _
  %s6 = ssub.s32 1, %s4
  %s7 = scalar_select 0, %s6, %s4
  $region1: #{tpu_custom_call.1} parent=0
    #allocation2 [shape = 'u8[8192]{0}', space=vmem, size = 0x2000, scoped, tag = 'input window, operand 0, single buffered']
    #allocation3 [shape = 's32[1]{0}', space=sflag, size = 0x4, scoped, tag = 'scoped memory for tpu_custom_call.1']
    #allocation4 [shape = 's32[1]{0}', space=sflag, size = 0x4, scoped, tag = 'scoped memory for tpu_custom_call.1']
    #allocation5 [shape = 'u8[8192]{0}', space=vmem, size = 0x2000, scoped, tag = 'input window, operand 1, single buffered']
    #allocation6 [shape = 's32[1]{0}', space=sflag, size = 0x4, scoped, tag = 'scoped memory for tpu_custom_call.1']
    #allocation7 [shape = 'u8[8192]{0}', space=vmem, size = 0x2000, scoped, tag = 'output window, operand 0, single buffered']
    %8 = vsyncpa [#allocation3], 0
    %9 = vsyncpa [#allocation6], 0
    %10 = vsyncpa [#allocation4], 0
    // Predicated region
    $region2: #{tpu_custom_call.1} parent=1 // pred_check
      _
    $region3: #{tpu_custom_call.1} parent=1 // pred_check_branch
      %12 = sbr.rel (0) target = $region5
    $region4: #{tpu_custom_call.1} parent=1 // pred_region
      %s14 = ssub.s32 256, 256
      %15 = vsyncadd [#allocation3], %s14
      %s17 = sshll.u32 [#allocation2], 4
      %s18 = int_to_ptr.vmem [resolvable:$true] %s17
      %20 = dma.hbm_to_vmem [thread:$0]  %s0, 256, %s18, [#allocation3]
    $region5: #{tpu_custom_call.1} parent=1 // pred_fallthru
      _
    // Predicated region
    $region6: #{tpu_custom_call.1} parent=1 // pred_check
      _
    $region7: #{tpu_custom_call.1} parent=1 // pred_check_branch
      %22 = sbr.rel (0) target = $region9
    $region8: #{tpu_custom_call.1} parent=1 // pred_region
      %s24 = ssub.s32 256, 256
      %25 = vsyncadd [#allocation6], %s24
      %s27 = sshll.u32 [#allocation5], 4
      %s28 = int_to_ptr.vmem [resolvable:$true] %s27
      %30 = dma.hbm_to_vmem [thread:$0]  %s1, 256, %s28, [#allocation6]
    $region9: #{tpu_custom_call.1} parent=1 // pred_fallthru
      _
    // Predicated region
    $region10: #{tpu_custom_call.1} parent=1 // pred_check
      _
    $region11: #{tpu_custom_call.1} parent=1 // pred_check_branch
      %32 = sbr.rel (0) target = $region13
    $region12: #{tpu_custom_call.1} parent=1 // pred_region
      _
    $region13: #{tpu_custom_call.1} parent=1 // pred_fallthru
      _
    // Predicated region
    $region14: #{tpu_custom_call.1} parent=1 // pred_check
      _
    $region15: #{tpu_custom_call.1} parent=1 // pred_check_branch
      %34 = sbr.rel (0) target = $region17
    $region16: #{tpu_custom_call.1} parent=1 // pred_region
      %35 = dma.done [#allocation3], 256
    $region17: #{tpu_custom_call.1} parent=1 // pred_fallthru
      _
    // Predicated region
    $region18: #{tpu_custom_call.1} parent=1 // pred_check
      _
    $region19: #{tpu_custom_call.1} parent=1 // pred_check_branch
      %37 = sbr.rel (0) target = $region21
    $region20: #{tpu_custom_call.1} parent=1 // pred_region
      %38 = dma.done [#allocation6], 256
    $region21: #{tpu_custom_call.1} parent=1 // pred_fallthru
      _
    %v39 = vld [vmem:[#allocation2] sm:$0xff]
    %v40 = vld [vmem:[#allocation2 + $0x8] sm:$0xff]
    %v41 = vld [vmem:[#allocation5] sm:$0xff]
    %v42 = vld [vmem:[#allocation5 + $0x8] sm:$0xff]
    %v43 = vld [vmem:[%s2] sm:$0xff]
    %45 = vset.pattern.permute.xlu0 0
    %46 = vperm.xlu0 %45, %v43
    %v47 = vpop.permute.xlu0 %46
    %v49 = vmul.f32 %v41, %v47
    %v50 = vmul.f32 %v42, %v47
    %v51 = vadd.f32 %v39, %v49
    %v52 = vadd.f32 %v40, %v50
    %53 = vst [vmem:[#allocation7] sm:$0xff] %v51
    %54 = vst [vmem:[#allocation7 + $0x8] sm:$0xff] %v52
    // Predicated region
    $region22: #{tpu_custom_call.1} parent=1 // pred_check
      _
    $region23: #{tpu_custom_call.1} parent=1 // pred_check_branch
      %56 = sbr.rel (0) target = $region25
    $region24: #{tpu_custom_call.1} parent=1 // pred_region
      %s58 = ssub.s32 256, 256
      %59 = vsyncadd [#allocation4], %s58
      %s61 = sshll.u32 [#allocation7], 4
      %s62 = int_to_ptr.vmem [resolvable:$true] %s61
      %64 = dma.vmem_to_hbm [thread:$0]  %s62, 256, %s3, [#allocation4]
    $region25: #{tpu_custom_call.1} parent=1 // pred_fallthru
      _
    // Predicated region
    $region26: #{tpu_custom_call.1} parent=1 // pred_check
      _
    $region27: #{tpu_custom_call.1} parent=1 // pred_check_branch
      %66 = sbr.rel (0) target = $region29
    $region28: #{tpu_custom_call.1} parent=1 // pred_region
      %67 = dma.done [#allocation4], 256
    $region29: #{tpu_custom_call.1} parent=1 // pred_fallthru
      _
    %68 = vsyncpa [#allocation3], 1
    %69 = vsyncpa [#allocation6], 1
    %70 = vsyncpa [#allocation4], 1

</llo_original>
